<compile_context>
chip_gen: v6e
topology: v6e:2x2x1
jax: 0.10.0
libtpu: 0.0.40
codegen_flags: <defaults>
</compile_context>

<pallas_src>
import functools

import jax
import jax.numpy as jnp
from jax.experimental import pallas as pl
from jax.experimental.pallas import tpu as pltpu

LN_EPS = 1e-5                        # torch.nn.LayerNorm default
LANE = 128                           # vreg lane width
SUBLANE = 8                          # f32 sublane granule
MAX_TM = 512                         # review: keep tm in 256-512 class (v5e store slot / v7x VMEM)
GRID_MIN_STEPS = 4                   # keep >= 4 row tiles when possible (v7x megacore balance)
VMEM_BUDGET_BYTES = 24 * 1024 * 1024  # budget for explicit x/out/weight buffers
VMEM_LIMIT_BYTES = 48 * 1024 * 1024   # scoped limit: > 16/32 MiB defaults, < v7x 64 MiB physical


def _round_up(x, m):
    return ((x + m - 1) // m) * m


def _choose_tm(m, in_cols, hid_cols, out_cols, itemsize):
    """Row-tile size from a VMEM budget + megacore / sublane-packing constraints."""
    granule = max(SUBLANE, 32 // max(itemsize, 1))   # 8 f32, 16 bf16, 32 int8/fp8
    # Fixed VMEM: weights + stacked (3,C) params.  Budgeted x2 (double-buffered) even
    # though Buffered(1) is requested, to stay safe if the compiler keeps two buffers.
    fixed = 2 * itemsize * (in_cols * hid_cols + hid_cols * out_cols
                            + SUBLANE * (hid_cols + out_cols))
    # Per-row VMEM: double-buffered x/out tiles + f32 h/y intermediates (2x slack for
    # compiler-internal scratch / spills).
    per_row = 2 * itemsize * (in_cols + out_cols) + 2 * 4 * (hid_cols + out_cols)
    avail = max(VMEM_BUDGET_BYTES - fixed, per_row * granule)
    tm = avail // per_row
    # v7x megacore: aim for >= GRID_MIN_STEPS grid steps so both TensorCores get work
    # (no effect on v5e/v6e beyond keeping the pipeline non-degenerate).
    tm = min(tm, MAX_TM, _round_up(pl.cdiv(m, GRID_MIN_STEPS), granule))
    return max(granule, (tm // granule) * granule)


def _layernorm_f32(h, gamma, beta):
    """LayerNorm over the last axis (biased variance, matches torch), all f32."""
    mu = jnp.mean(h, axis=-1, keepdims=True)
    centered = h - mu
    var = jnp.mean(centered * centered, axis=-1, keepdims=True)
    return centered * jax.lax.rsqrt(var + LN_EPS) * gamma + beta


def mlp_kernel(x_ref, w1_ref, p1_ref, w2_ref, p2_ref, o_ref, *, mxu_dtype):
    x = x_ref[...]                                   # (tm, in_ch)
    if mxu_dtype is not None:
        x = x.astype(mxu_dtype)                      # bf16 MXU operands (optional)

    p1 = p1_ref[...].astype(jnp.float32)             # (3, hidden): bias, gamma, beta
    p2 = p2_ref[...].astype(jnp.float32)             # (3, out_ch): bias, gamma, beta

    # ---- linear1 (MXU, f32 accumulate) + norm1 + relu ----
    h = jnp.dot(x, w1_ref[...], preferred_element_type=jnp.float32)
    h = h + p1[0:1, :]
    h = jnp.maximum(_layernorm_f32(h, p1[1:2, :], p1[2:3, :]), 0.0)

    # ---- linear2 + norm2 + relu ----
    y = jnp.dot(h.astype(w2_ref.dtype), w2_ref[...],
                preferred_element_type=jnp.float32)
    y = y + p2[0:1, :]
    y = jnp.maximum(_layernorm_f32(y, p2[1:2, :], p2[2:3, :]), 0.0)

    o_ref[...] = y.astype(o_ref.dtype)


@functools.partial(jax.jit, static_argnames=("use_bf16_matmul",))
def mlp_forward(x, params, use_bf16_matmul=False):
    """x: (..., in_channel) -> (..., out_channel). Weights stored as (in, out)."""
    w1, b1, g1, be1, w2, b2, g2, be2 = params
    in_ch = x.shape[-1]
    hidden = w1.shape[1]
    out_ch = w2.shape[1]
    lead = x.shape[:-1]

    mxu_dtype = None
    if use_bf16_matmul and x.dtype == jnp.float32:
        mxu_dtype = jnp.bfloat16
        w1 = w1.astype(jnp.bfloat16)
        w2 = w2.astype(jnp.bfloat16)

    # Stack per-layer (C,) params into one (3, C) f32 array per layer (2 DMAs, not 6).
    p1 = jnp.stack([b1, g1, be1]).astype(jnp.float32)
    p2 = jnp.stack([b2, g2, be2]).astype(jnp.float32)

    # Flatten leading dims into the row axis.  No row padding: grid = cdiv(m, tm) and the
    # ragged final block is masked by Pallas (rows are independent, garbage rows dropped).
    x2d = x.reshape(-1, in_ch)
    m = x2d.shape[0]

    # Lane-align in_channel only when it is large and unaligned (keeps the streamed x DMA
    # and the first matmul's K dim unmasked; skipped for small in_ch where the pad copy
    # would just inflate x HBM traffic).
    ip = in_ch
    if in_ch > LANE and in_ch % LANE != 0:
        ip = _round_up(in_ch, LANE)
        x2d = jnp.pad(x2d, ((0, 0), (0, ip - in_ch)))
        w1 = jnp.pad(w1, ((0, ip - in_ch), (0, 0)))

    tm = _choose_tm(m, ip, hidden, out_ch, jnp.dtype(x.dtype).itemsize)
    grid = (pl.cdiv(m, tm),)

    def _const(shape):
        # Constant across grid steps: fetch once, single VMEM buffer.
        return pl.BlockSpec(shape, lambda i: (0,) * len(shape),
                            pipeline_mode=pl.Buffered(1))

    kernel = functools.partial(mlp_kernel, mxu_dtype=mxu_dtype)

    out = pl.pallas_call(
        kernel,
        out_shape=jax.ShapeDtypeStruct((m, out_ch), x.dtype),
        grid=grid,
        in_specs=[
            pl.BlockSpec((tm, ip), lambda i: (i, 0)),   # x row tile (streamed, double-buffered)
            _const((ip, hidden)),                       # w1
            _const((3, hidden)),                        # bias1 / gamma1 / beta1
            _const((hidden, out_ch)),                   # w2
            _const((3, out_ch)),                        # bias2 / gamma2 / beta2
        ],
        out_specs=pl.BlockSpec((tm, out_ch), lambda i: (i, 0)),
        compiler_params=pltpu.CompilerParams(
            dimension_semantics=("parallel",),
            vmem_limit_bytes=VMEM_LIMIT_BYTES),
    )(x2d, w1, p1, w2, p2)

    return out.reshape(*lead, out_ch)


def init_mlp_params(key, in_channel, out_channel, hidden=32, dtype=jnp.float32):
    """Matches the PyTorch init: xavier_uniform_ weights, bias = 0.01,
    LayerNorm gamma = 1, beta = 0. Weights stored as (in, out)."""
    k1, k2 = jax.random.split(key)

    def xavier_uniform(k, fan_in, fan_out):
        limit = (6.0 / (fan_in + fan_out)) ** 0.5
        return jax.random.uniform(k, (fan_in, fan_out), dtype, -limit, limit)

    w1 = xavier_uniform(k1, in_channel, hidden)
    b1 = jnp.full((hidden,), 0.01, dtype)
    g1 = jnp.ones((hidden,), dtype)
    be1 = jnp.zeros((hidden,), dtype)

    w2 = xavier_uniform(k2, hidden, out_channel)
    b2 = jnp.full((out_channel,), 0.01, dtype)
    g2 = jnp.ones((out_channel,), dtype)
    be2 = jnp.zeros((out_channel,), dtype)

    return (w1, b1, g1, be1, w2, b2, g2, be2)


def _ln_ref(h, gamma, beta):
    mu = jnp.mean(h, axis=-1, keepdims=True)
    var = jnp.mean((h - mu) ** 2, axis=-1, keepdims=True)  # biased, matches torch
    return (h - mu) * jax.lax.rsqrt(var + LN_EPS) * gamma + beta


def mlp_reference(x, params):
    """Plain-JAX reference for correctness checking."""
    w1, b1, g1, be1, w2, b2, g2, be2 = params
    h = x @ w1 + b1
    h = jnp.maximum(_ln_ref(h, g1, be1), 0.0)
    y = h @ w2 + b2
    return jnp.maximum(_ln_ref(y, g2, be2), 0.0)


if __name__ == "__main__":
    key = jax.random.PRNGKey(0)
    kx, kp, kx2, kp2 = jax.random.split(key, 4)

    # --- small config matching the module defaults (hidden=32) ---
    batch, seq, in_channel, hidden, out_channel = 2, 8, 4, 32, 16
    x = jax.random.normal(kx, (batch, seq, in_channel), jnp.float32)
    params = init_mlp_params(kp, in_channel, out_channel, hidden=hidden)

    out = jax.block_until_ready(mlp_forward(x, params))
    ref = mlp_reference(x, params)
    assert out.shape == (batch, seq, out_channel), out.shape
    assert jnp.allclose(out, ref, atol=1e-5, rtol=1e-5), "f32 mismatch vs reference"

    # --- larger, lane-unaligned config: multi-step grid, ragged final row tile,
    #     non-multiple-of-128 hidden / out channels ---
    batch2, seq2, in2, hid2, out2 = 3, 50, 48, 160, 144
    x2 = jax.random.normal(kx2, (batch2, seq2, in2), jnp.float32)
    params2 = init_mlp_params(kp2, in2, out2, hidden=hid2)
    out_big = jax.block_until_ready(mlp_forward(x2, params2))
    ref_big = mlp_reference(x2, params2)
    assert out_big.shape == (batch2, seq2, out2), out_big.shape
    assert jnp.allclose(out_big, ref_big, atol=1e-4, rtol=1e-4), "f32 (large) mismatch"

    # --- optional bf16-MXU path (f32 LayerNorm math retained), loose tolerance ---
    out_bf16 = jax.block_until_ready(mlp_forward(x, params, use_bf16_matmul=True))
    assert out_bf16.shape == (batch, seq, out_channel), out_bf16.shape
    assert jnp.allclose(out_bf16, ref, atol=0.25, rtol=0.0), "bf16 matmul path mismatch"

    print("KERNEL_OK")
</pallas_src>

<mosaic_0001>
module attributes {stable_mosaic.version = 11 : i64} {
  func.func @mlp_kernel(%arg0: i32, %arg1: memref<8x4xf32, #tpu.memory_space<vmem>>, %arg2: memref<4x32xf32, #tpu.memory_space<vmem>>, %arg3: memref<3x32xf32, #tpu.memory_space<vmem>>, %arg4: memref<32x16xf32, #tpu.memory_space<vmem>>, %arg5: memref<3x16xf32, #tpu.memory_space<vmem>>, %arg6: memref<8x16xf32, #tpu.memory_space<vmem>>) attributes {dimension_semantics = [#tpu.dimension_semantics<parallel>], iteration_bounds = array<i64: 2>, scalar_prefetch = 0 : i64, scratch_operands = 0 : i64, tpu.core_type = #tpu.core_type<tc>, window_params = [{transform_indices = @transform_0, window_bounds = array<i64: 8, 4>}, {pipeline_mode = #tpu.pipeline_mode<synchronous>, transform_indices = @transform_1, window_bounds = array<i64: 4, 32>}, {pipeline_mode = #tpu.pipeline_mode<synchronous>, transform_indices = @transform_2, window_bounds = array<i64: 3, 32>}, {pipeline_mode = #tpu.pipeline_mode<synchronous>, transform_indices = @transform_3, window_bounds = array<i64: 32, 16>}, {pipeline_mode = #tpu.pipeline_mode<synchronous>, transform_indices = @transform_4, window_bounds = array<i64: 3, 16>}, {transform_indices = @transform_5, window_bounds = array<i64: 8, 16>}]} {
    %c0 = arith.constant 0 : index
    %c0_0 = arith.constant 0 : index
    %0 = vector.load %arg1[%c0, %c0_0] : memref<8x4xf32, #tpu.memory_space<vmem>>, vector<8x4xf32>
    %c0_1 = arith.constant 0 : index
    %c0_2 = arith.constant 0 : index
    %1 = vector.load %arg3[%c0_1, %c0_2] : memref<3x32xf32, #tpu.memory_space<vmem>>, vector<3x32xf32>
    %c0_3 = arith.constant 0 : index
    %c0_4 = arith.constant 0 : index
    %2 = vector.load %arg5[%c0_3, %c0_4] : memref<3x16xf32, #tpu.memory_space<vmem>>, vector<3x16xf32>
    %c0_5 = arith.constant 0 : index
    %c0_6 = arith.constant 0 : index
    %3 = vector.load %arg2[%c0_5, %c0_6] : memref<4x32xf32, #tpu.memory_space<vmem>>, vector<4x32xf32>
    %cst = arith.constant dense<0.000000e+00> : vector<8x32xf32>
    %4 = tpu.matmul %0, %3, %cst {dimension_numbers = #tpu.dot_dimension_numbers<[1], [0], [0], [1], [0, 0, 1, 1], [], []>} : vector<8x4xf32>, vector<4x32xf32>, vector<8x32xf32> -> vector<8x32xf32>
    %5 = vector.extract_strided_slice %1 {offsets = [0, 0], sizes = [1, 32], strides = [1, 1]} : vector<3x32xf32> to vector<1x32xf32>
    %6 = vector.broadcast %5 : vector<1x32xf32> to vector<8x32xf32>
    %7 = arith.addf %4, %6 : vector<8x32xf32>
    %8 = vector.extract_strided_slice %1 {offsets = [1, 0], sizes = [1, 32], strides = [1, 1]} : vector<3x32xf32> to vector<1x32xf32>
    %9 = vector.extract_strided_slice %1 {offsets = [2, 0], sizes = [1, 32], strides = [1, 1]} : vector<3x32xf32> to vector<1x32xf32>
    %cst_7 = arith.constant dense<0.000000e+00> : vector<8xf32>
    %10 = vector.multi_reduction <add>, %7, %cst_7 [1] : vector<8x32xf32> to vector<8xf32>
    %11 = vector.shape_cast %10 : vector<8xf32> to vector<8x1xf32>
    %cst_8 = arith.constant 3.200000e+01 : f32
    %12 = vector.broadcast %cst_8 : f32 to vector<8x1xf32>
    %13 = arith.divf %11, %12 : vector<8x1xf32>
    %14 = vector.broadcast %13 : vector<8x1xf32> to vector<8x32xf32>
    %15 = arith.subf %7, %14 : vector<8x32xf32>
    %16 = arith.mulf %15, %15 : vector<8x32xf32>
    %cst_9 = arith.constant dense<0.000000e+00> : vector<8xf32>
    %17 = vector.multi_reduction <add>, %16, %cst_9 [1] : vector<8x32xf32> to vector<8xf32>
    %18 = vector.shape_cast %17 : vector<8xf32> to vector<8x1xf32>
    %cst_10 = arith.constant 3.200000e+01 : f32
    %19 = vector.broadcast %cst_10 : f32 to vector<8x1xf32>
    %20 = arith.divf %18, %19 : vector<8x1xf32>
    %cst_11 = arith.constant 9.99999974E-6 : f32
    %21 = vector.broadcast %cst_11 : f32 to vector<8x1xf32>
    %22 = arith.addf %20, %21 : vector<8x1xf32>
    %23 = math.rsqrt %22 : vector<8x1xf32>
    %24 = vector.broadcast %23 : vector<8x1xf32> to vector<8x32xf32>
    %25 = arith.mulf %15, %24 : vector<8x32xf32>
    %26 = vector.broadcast %8 : vector<1x32xf32> to vector<8x32xf32>
    %27 = arith.mulf %25, %26 : vector<8x32xf32>
    %28 = vector.broadcast %9 : vector<1x32xf32> to vector<8x32xf32>
    %29 = arith.addf %27, %28 : vector<8x32xf32>
    %cst_12 = arith.constant 0.000000e+00 : f32
    %30 = vector.broadcast %cst_12 : f32 to vector<8x32xf32>
    %31 = arith.maximumf %29, %30 : vector<8x32xf32>
    %c0_13 = arith.constant 0 : index
    %c0_14 = arith.constant 0 : index
    %32 = vector.load %arg4[%c0_13, %c0_14] : memref<32x16xf32, #tpu.memory_space<vmem>>, vector<32x16xf32>
    %cst_15 = arith.constant dense<0.000000e+00> : vector<8x16xf32>
    %33 = tpu.matmul %31, %32, %cst_15 {dimension_numbers = #tpu.dot_dimension_numbers<[1], [0], [0], [1], [0, 0, 1, 1], [], []>} : vector<8x32xf32>, vector<32x16xf32>, vector<8x16xf32> -> vector<8x16xf32>
    %34 = vector.extract_strided_slice %2 {offsets = [0, 0], sizes = [1, 16], strides = [1, 1]} : vector<3x16xf32> to vector<1x16xf32>
    %35 = vector.broadcast %34 : vector<1x16xf32> to vector<8x16xf32>
    %36 = arith.addf %33, %35 : vector<8x16xf32>
    %37 = vector.extract_strided_slice %2 {offsets = [1, 0], sizes = [1, 16], strides = [1, 1]} : vector<3x16xf32> to vector<1x16xf32>
    %38 = vector.extract_strided_slice %2 {offsets = [2, 0], sizes = [1, 16], strides = [1, 1]} : vector<3x16xf32> to vector<1x16xf32>
    %cst_16 = arith.constant dense<0.000000e+00> : vector<8xf32>
    %39 = vector.multi_reduction <add>, %36, %cst_16 [1] : vector<8x16xf32> to vector<8xf32>
    %40 = vector.shape_cast %39 : vector<8xf32> to vector<8x1xf32>
    %cst_17 = arith.constant 1.600000e+01 : f32
    %41 = vector.broadcast %cst_17 : f32 to vector<8x1xf32>
    %42 = arith.divf %40, %41 : vector<8x1xf32>
    %43 = vector.broadcast %42 : vector<8x1xf32> to vector<8x16xf32>
    %44 = arith.subf %36, %43 : vector<8x16xf32>
    %45 = arith.mulf %44, %44 : vector<8x16xf32>
    %cst_18 = arith.constant dense<0.000000e+00> : vector<8xf32>
    %46 = vector.multi_reduction <add>, %45, %cst_18 [1] : vector<8x16xf32> to vector<8xf32>
    %47 = vector.shape_cast %46 : vector<8xf32> to vector<8x1xf32>
    %cst_19 = arith.constant 1.600000e+01 : f32
    %48 = vector.broadcast %cst_19 : f32 to vector<8x1xf32>
    %49 = arith.divf %47, %48 : vector<8x1xf32>
    %cst_20 = arith.constant 9.99999974E-6 : f32
    %50 = vector.broadcast %cst_20 : f32 to vector<8x1xf32>
    %51 = arith.addf %49, %50 : vector<8x1xf32>
    %52 = math.rsqrt %51 : vector<8x1xf32>
    %53 = vector.broadcast %52 : vector<8x1xf32> to vector<8x16xf32>
    %54 = arith.mulf %44, %53 : vector<8x16xf32>
    %55 = vector.broadcast %37 : vector<1x16xf32> to vector<8x16xf32>
    %56 = arith.mulf %54, %55 : vector<8x16xf32>
    %57 = vector.broadcast %38 : vector<1x16xf32> to vector<8x16xf32>
    %58 = arith.addf %56, %57 : vector<8x16xf32>
    %cst_21 = arith.constant 0.000000e+00 : f32
    %59 = vector.broadcast %cst_21 : f32 to vector<8x16xf32>
    %60 = arith.maximumf %58, %59 : vector<8x16xf32>
    %c0_22 = arith.constant 0 : index
    %c0_23 = arith.constant 0 : index
    %61 = vector.load %arg6[%c0_22, %c0_23] : memref<8x16xf32, #tpu.memory_space<vmem>>, vector<8x16xf32>
    tpu.vector_store %arg6[%c0_22, %c0_23], %60 {strides = array<i32>} : memref<8x16xf32, #tpu.memory_space<vmem>>, vector<8x16xf32>,
    return
  }
  func.func @transform_0(%arg0: i32) -> (i32, i32) {
    %c0_i32 = arith.constant 0 : i32
    %c0_i32_0 = arith.constant 0 : i32
    return %arg0, %c0_i32 : i32, i32
  }
  func.func @transform_1(%arg0: i32) -> (i32, i32) {
    %c0_i32 = arith.constant 0 : i32
    %c0_i32_0 = arith.constant 0 : i32
    %c0_i32_1 = arith.constant 0 : i32
    return %c0_i32, %c0_i32_0 : i32, i32
  }
  func.func @transform_2(%arg0: i32) -> (i32, i32) {
    %c0_i32 = arith.constant 0 : i32
    %c0_i32_0 = arith.constant 0 : i32
    %c0_i32_1 = arith.constant 0 : i32
    return %c0_i32, %c0_i32_0 : i32, i32
  }
  func.func @transform_3(%arg0: i32) -> (i32, i32) {
    %c0_i32 = arith.constant 0 : i32
    %c0_i32_0 = arith.constant 0 : i32
    %c0_i32_1 = arith.constant 0 : i32
    return %c0_i32, %c0_i32_0 : i32, i32
  }
  func.func @transform_4(%arg0: i32) -> (i32, i32) {
    %c0_i32 = arith.constant 0 : i32
    %c0_i32_0 = arith.constant 0 : i32
    %c0_i32_1 = arith.constant 0 : i32
    return %c0_i32, %c0_i32_0 : i32, i32
  }
  func.func @transform_5(%arg0: i32) -> (i32, i32) {
    %c0_i32 = arith.constant 0 : i32
    %c0_i32_0 = arith.constant 0 : i32
    return %arg0, %c0_i32 : i32, i32
  }
}

</mosaic_0001>

<llo_original>
// kernel: mlp_forward.1
$region0: #{mlp_forward.1}
  #allocation0 [shape = 'u32[]', space=smem, size = 0x4, offset = 0x4, fixed_abs, tag = 'smem constant byte address 0x4 - core index']
  #allocation1 [shape = 'u32[144,128]{1,0:T(1,128)}', space=vmem, size = 0x12000, scoped, tag = 'internal scratch']
  %s0 = inlined_call_operand.vmem [shape: f32[16,4], index: 0, kind: input, shape index: {}]
  %s1 = inlined_call_operand.vmem [shape: f32[4,32], index: 1, kind: input, shape index: {}]
  %s2 = inlined_call_operand.vmem [shape: f32[3,32], index: 2, kind: input, shape index: {}]
  %s3 = inlined_call_operand.vmem [shape: f32[32,16], index: 3, kind: input, shape index: {}]
  %s4 = inlined_call_operand.vmem [shape: f32[3,16], index: 4, kind: input, shape index: {}]
  %s5 = inlined_call_operand.hbm [shape: f32[16,16], index: 5, kind: output, shape index: {}]
  %s6 = sld [smem:[#allocation0]]
  $region53: #{mlp_forward.1} parent=0
    _
  %s8 = ssub.s32 1, %s6
  %s9 = scalar_select 0, %s8, %s6
  $region1: #{mlp_forward.1} parent=0
    #allocation2 [shape = 'u8[8192]{0}', space=vmem, size = 0x2000, scoped, tag = 'output window, operand 0']
    #allocation3 [shape = 's32[2]{0}', space=sflag, size = 0x8, scoped, tag = 'scoped memory for mlp_forward.1']
    %10 = vsyncpa [#allocation3], 0
    %s11 = scalar_lea.sflag [#allocation3], 1
    %12 = vsyncpa %s11, 0
    loop: start=0, step=1, limit=4
    $region2: #{mlp_forward.1} parent=1 // loop_pre_header
      _
    $region3: #{mlp_forward.1} parent=1 // loop_header
      %s14 = sphi 0, %s18
      %p15 = scmp.ge.s32.totalorder %s14, 4
      %s24 = sphi 0, %s26
      %s27 = sphi 0, %s24
      %s28 = sphi 0, %s27
      %s44 = sphi 0, %s28
      %s48 = sphi 0, %s48
      %s50 = sphi 0, %s48
      %s51 = sphi 0, %s50
      %s65 = sphi 0, %s51
      %s69 = sphi 0, %s69
      %s71 = sphi 0, %s69
      %s72 = sphi 0, %s71
      %s86 = sphi 0, %s72
      %s90 = sphi 0, %s90
      %s92 = sphi 0, %s90
      %s93 = sphi 0, %s92
      %s107 = sphi 0, %s93
      %s111 = sphi 0, %s111
      %s113 = sphi 0, %s111
      %s114 = sphi 0, %s113
      %s128 = sphi 0, %s114
      %s134 = sphi 0, %s136
      %s137 = sphi 0, %s134
      %s138 = sphi 0, %s137
      %s154 = sphi 0, %s138
    $region4: #{mlp_forward.1} parent=1 // loop_header_branch
      %17 = sbr.rel (%p15) target = $region8
    $region5: #{mlp_forward.1} parent=1 // loop_body
      %s19 = ssub.s32 %s14, 1
      %s20 = ssub.s32 %s14, 2
      %s21 = sadd.s32 %s14, 1
      %s22 = ssub.s32 %s14, %s21
      %p23 = scmp.eq.s32.totalorder %s22, 0
      %s25 = sadd.s32 %s24, 1
      %s26 = scalar_select %p23, %s24, %s25
      %p29 = pneg %p23
      %p30 = scmp.eq.s32.totalorder %s14, 1
      %p31 = por %p29, %p30
      %p32 = scmp.ne.s32.totalorder %s24, %s27
      %p33 = scmp.eq.s32.totalorder %s14, 0
      %p34 = por %p32, %p33
      %p35 = scmp.ne.s32.totalorder %s24, %s27
      %p36 = scmp.eq.s32.totalorder %s19, 1
      %p37 = por %p35, %p36
      %p38 = scmp.ne.s32.totalorder %s27, %s28
      %p39 = scmp.eq.s32.totalorder %s19, 0
      %p40 = por %p38, %p39
      %p41 = scmp.ne.s32.totalorder %s27, %s28
      %p42 = scmp.eq.s32.totalorder %s20, 1
      %p43 = por %p41, %p42
      %p45 = scmp.ne.s32.totalorder %s28, %s44
      %p46 = scmp.eq.s32.totalorder %s20, 0
      %p47 = por %p45, %p46
      %s49 = sadd.s32 %s48, 1
      %p52 = scmp.eq.s32.totalorder %s14, 1
      %p53 = scmp.ne.s32.totalorder %s48, %s50
      %p54 = scmp.eq.s32.totalorder %s14, 0
      %p55 = por %p53, %p54
      %p56 = scmp.ne.s32.totalorder %s48, %s50
      %p57 = scmp.eq.s32.totalorder %s19, 1
      %p58 = por %p56, %p57
      %p59 = scmp.ne.s32.totalorder %s50, %s51
      %p60 = scmp.eq.s32.totalorder %s19, 0
      %p61 = por %p59, %p60
      %p62 = scmp.ne.s32.totalorder %s50, %s51
      %p63 = scmp.eq.s32.totalorder %s20, 1
      %p64 = por %p62, %p63
      %p66 = scmp.ne.s32.totalorder %s51, %s65
      %p67 = scmp.eq.s32.totalorder %s20, 0
      %p68 = por %p66, %p67
      %s70 = sadd.s32 %s69, 1
      %p73 = scmp.eq.s32.totalorder %s14, 1
      %p74 = scmp.ne.s32.totalorder %s69, %s71
      %p75 = scmp.eq.s32.totalorder %s14, 0
      %p76 = por %p74, %p75
      %p77 = scmp.ne.s32.totalorder %s69, %s71
      %p78 = scmp.eq.s32.totalorder %s19, 1
      %p79 = por %p77, %p78
      %p80 = scmp.ne.s32.totalorder %s71, %s72
      %p81 = scmp.eq.s32.totalorder %s19, 0
      %p82 = por %p80, %p81
      %p83 = scmp.ne.s32.totalorder %s71, %s72
      %p84 = scmp.eq.s32.totalorder %s20, 1
      %p85 = por %p83, %p84
      %p87 = scmp.ne.s32.totalorder %s72, %s86
      %p88 = scmp.eq.s32.totalorder %s20, 0
      %p89 = por %p87, %p88
      %s91 = sadd.s32 %s90, 1
      %p94 = scmp.eq.s32.totalorder %s14, 1
      %p95 = scmp.ne.s32.totalorder %s90, %s92
      %p96 = scmp.eq.s32.totalorder %s14, 0
      %p97 = por %p95, %p96
      %p98 = scmp.ne.s32.totalorder %s90, %s92
      %p99 = scmp.eq.s32.totalorder %s19, 1
      %p100 = por %p98, %p99
      %p101 = scmp.ne.s32.totalorder %s92, %s93
      %p102 = scmp.eq.s32.totalorder %s19, 0
      %p103 = por %p101, %p102
      %p104 = scmp.ne.s32.totalorder %s92, %s93
      %p105 = scmp.eq.s32.totalorder %s20, 1
      %p106 = por %p104, %p105
      %p108 = scmp.ne.s32.totalorder %s93, %s107
      %p109 = scmp.eq.s32.totalorder %s20, 0
      %p110 = por %p108, %p109
      %s112 = sadd.s32 %s111, 1
      %p115 = scmp.eq.s32.totalorder %s14, 1
      %p116 = scmp.ne.s32.totalorder %s111, %s113
      %p117 = scmp.eq.s32.totalorder %s14, 0
      %p118 = por %p116, %p117
      %p119 = scmp.ne.s32.totalorder %s111, %s113
      %p120 = scmp.eq.s32.totalorder %s19, 1
      %p121 = por %p119, %p120
      %p122 = scmp.ne.s32.totalorder %s113, %s114
      %p123 = scmp.eq.s32.totalorder %s19, 0
      %p124 = por %p122, %p123
      %p125 = scmp.ne.s32.totalorder %s113, %s114
      %p126 = scmp.eq.s32.totalorder %s20, 1
      %p127 = por %p125, %p126
      %p129 = scmp.ne.s32.totalorder %s114, %s128
      %p130 = scmp.eq.s32.totalorder %s20, 0
      %p131 = por %p129, %p130
      %s132 = ssub.s32 %s14, %s21
      %p133 = scmp.eq.s32.totalorder %s132, 0
      %s135 = sadd.s32 %s134, 1
      %s136 = scalar_select %p133, %s134, %s135
      %p139 = pneg %p133
      %p140 = scmp.eq.s32.totalorder %s14, 1
      %p141 = por %p139, %p140
      %p142 = scmp.ne.s32.totalorder %s134, %s137
      %p143 = scmp.eq.s32.totalorder %s14, 0
      %p144 = por %p142, %p143
      %p145 = scmp.ne.s32.totalorder %s134, %s137
      %p146 = scmp.eq.s32.totalorder %s19, 1
      %p147 = por %p145, %p146
      %p148 = scmp.ne.s32.totalorder %s137, %s138
      %p149 = scmp.eq.s32.totalorder %s19, 0
      %p150 = por %p148, %p149
      %p151 = scmp.ne.s32.totalorder %s137, %s138
      %p152 = scmp.eq.s32.totalorder %s20, 1
      %p153 = por %p151, %p152
      %p155 = scmp.ne.s32.totalorder %s138, %s154
      %p156 = scmp.eq.s32.totalorder %s20, 0
      %p157 = por %p155, %p156
      %p158 = scmp.le.s32.totalorder 1, %s14
      %p159 = scmp.lt.s32.totalorder %s14, 3
      %p160 = pnand %p158, %p159
      %p161 = pneg %p160
      // Predicated region
      $region9: #{mlp_forward.1} parent=5 // pred_check
        _
      $region10: #{mlp_forward.1} parent=5 // pred_check_branch
        %163 = sbr.rel (%p160) target = $region12
      $region11: #{mlp_forward.1} parent=5 // pred_region
        %s164 = ssub.s32 %s14, 1
        // Predicated region
        $region13: #{mlp_forward.1} parent=11 // pred_check
          %p165 = pneg %p61
        $region14: #{mlp_forward.1} parent=11 // pred_check_branch
          %167 = sbr.rel (%p165) target = $region16
        $region15: #{mlp_forward.1} parent=11 // pred_region
          _
        $region16: #{mlp_forward.1} parent=11 // pred_fallthru
          _
        // Predicated region
        $region17: #{mlp_forward.1} parent=11 // pred_check
          %p168 = pneg %p82
        $region18: #{mlp_forward.1} parent=11 // pred_check_branch
          %170 = sbr.rel (%p168) target = $region20
        $region19: #{mlp_forward.1} parent=11 // pred_region
          _
        $region20: #{mlp_forward.1} parent=11 // pred_fallthru
          _
        // Predicated region
        $region21: #{mlp_forward.1} parent=11 // pred_check
          %p171 = pneg %p103
        $region22: #{mlp_forward.1} parent=11 // pred_check_branch
          %173 = sbr.rel (%p171) target = $region24
        $region23: #{mlp_forward.1} parent=11 // pred_region
          _
        $region24: #{mlp_forward.1} parent=11 // pred_fallthru
          _
        // Predicated region
        $region25: #{mlp_forward.1} parent=11 // pred_check
          %p174 = pneg %p124
        $region26: #{mlp_forward.1} parent=11 // pred_check_branch
          %176 = sbr.rel (%p174) target = $region28
        $region27: #{mlp_forward.1} parent=11 // pred_region
          _
        $region28: #{mlp_forward.1} parent=11 // pred_fallthru
          _
      $region12: #{mlp_forward.1} parent=5 // pred_fallthru
        _
      %p177 = scmp.lt.s32.totalorder %s14, 2
      // Predicated region
      $region29: #{mlp_forward.1} parent=5 // pred_check
        %p178 = pneg %p177
      $region30: #{mlp_forward.1} parent=5 // pred_check_branch
        %180 = sbr.rel (%p178) target = $region32
      $region31: #{mlp_forward.1} parent=5 // pred_region
        // Predicated region
        $region33: #{mlp_forward.1} parent=31 // pred_check
          %p181 = pneg %p34
        $region34: #{mlp_forward.1} parent=31 // pred_check_branch
          %183 = sbr.rel (%p181) target = $region36
        $region35: #{mlp_forward.1} parent=31 // pred_region
          %p184 = scmp.lt.s32.totalorder %s14, 1
          %s185 = scalar_select %p184, %s14, 1
          %s186 = smul.addr %s185, 8
          %s187 = scalar_lea.vmem %s0, %s186
        $region36: #{mlp_forward.1} parent=31 // pred_fallthru
          _
      $region32: #{mlp_forward.1} parent=5 // pred_fallthru
        _
      %p188 = scmp.le.s32.totalorder 1, %s14
      %p189 = scmp.lt.s32.totalorder %s14, 3
      %p190 = pnand %p188, %p189
      %p191 = pneg %p190
      // Predicated region
      $region37: #{mlp_forward.1} parent=5 // pred_check
        _
      $region38: #{mlp_forward.1} parent=5 // pred_check_branch
        %193 = sbr.rel (%p190) target = $region40
      $region39: #{mlp_forward.1} parent=5 // pred_region
        %s194 = ssub.s32 %s14, 1
        %p195 = scmp.lt.s32.totalorder %s19, 1
        %s196 = scalar_select %p195, %s19, 1
        %s197 = smul.addr %s196, 8
        %s198 = scalar_lea.vmem %s0, %s197
        %p199 = pneg %p40
        %p200 = pneg %p37
        %p201 = pneg %p61
        %p202 = pneg %p58
        %p203 = pneg %p82
        %p204 = pneg %p79
        %p205 = pneg %p103
        %p206 = pneg %p100
        %p207 = pneg %p124
        %p208 = pneg %p121
        %p209 = pneg %p150
        %p210 = pneg %p147
        %s211 = sand.u32 %s137, 1
        %s212 = scalar_lea.sflag [#allocation3], %s211
        %s213 = sand.u32 %s137, 1
        %s214 = smul.addr %s213, 8
        %s215 = scalar_lea.vmem [#allocation2], %s214
        %p216 = scmp.lt.s32.totalorder %s19, 1
        %s217 = scalar_select %p216, %s19, 1
        %s218 = smul.addr %s217, 8
        %s219 = scalar_lea.vmem %s0, %s218
        %v220 = vld [vmem:[%s219] sm:$0xff]
        %v221 = vld [vmem:[%s2] sm:$0x7]
        %v222 = vld [vmem:[%s4] sm:$0x7]
        %v223 = vld [vmem:[%s1] sm:$0xf]
        %v224 = vlaneseq
        %v225 = vshrl.u32 %v224, 7
        %v226 = vsub.s32 0, %v225
        %v227 = vrot.slane %v221, %v226
        %vm228 = vcmask 31744
        %v230 = vsel %vm228, %v220, 0
        %vm232 = vcmask 1043456
        %v234 = vsel %vm232, %v223, 0
        %236 = vmatprep.subr.mxu0 0.0
        %237 = vmatpush1.msra.mxu0 0.0
        %238 = vmatprep.subr.mxu0 0.0
        %239 = vmatpush1.msra.mxu0 0.0
        %240 = vmatprep.subr.mxu0 0.0
        %241 = vmatpush1.msra.mxu0 0.0
        %242 = vmatprep.subr.mxu0 0.0
        %243 = vmatpush1.msra.mxu0 0.0
        %244 = vmatprep.subr.mxu0 0.0
        %245 = vmatpush1.msra.mxu0 0.0
        %246 = vmatprep.subr.mxu0 0.0
        %247 = vmatpush1.msra.mxu0 0.0
        %248 = vmatprep.subr.mxu0 0.0
        %249 = vmatpush1.msra.mxu0 0.0
        %250 = vmatprep.subr.mxu0 0.0
        %251 = vmatpush1.msra.mxu0 0.0
        %252 = vmatprep.subr.mxu0 0.0
        %253 = vmatpush1.msra.mxu0 0.0
        %254 = vmatprep.subr.mxu0 0.0
        %255 = vmatpush1.msra.mxu0 0.0
        %256 = vmatprep.subr.mxu0 0.0
        %257 = vmatpush1.msra.mxu0 0.0
        %258 = vmatprep.subr.mxu0 0.0
        %259 = vmatpush1.msra.mxu0 0.0
        %260 = vmatprep.subr.mxu0 0.0
        %261 = vmatpush1.msra.mxu0 0.0
        %262 = vmatprep.subr.mxu0 0.0
        %263 = vmatpush1.msra.mxu0 0.0
        %264 = vmatprep.subr.mxu0 0.0
        %265 = vmatpush1.msra.mxu0 0.0
        %266 = vmatprep.subr.mxu0 0.0
        %267 = vmatpush1.msra.mxu0 %v234
        %268 = vmatprep.subr.mxu0 0.0
        %269 = vmatpush2.msra.mxu0 0.0
        %270 = vmatprep.subr.mxu0 0.0
        %271 = vmatpush2.msra.mxu0 0.0
        %272 = vmatprep.subr.mxu0 0.0
        %273 = vmatpush2.msra.mxu0 0.0
        %274 = vmatprep.subr.mxu0 0.0
        %275 = vmatpush2.msra.mxu0 0.0
        %276 = vmatprep.subr.mxu0 0.0
        %277 = vmatpush2.msra.mxu0 0.0
        %278 = vmatprep.subr.mxu0 0.0
        %279 = vmatpush2.msra.mxu0 0.0
        %280 = vmatprep.subr.mxu0 0.0
        %281 = vmatpush2.msra.mxu0 0.0
        %282 = vmatprep.subr.mxu0 0.0
        %283 = vmatpush2.msra.mxu0 0.0
        %284 = vmatprep.subr.mxu0 0.0
        %285 = vmatpush2.msra.mxu0 0.0
        %286 = vmatprep.subr.mxu0 0.0
        %287 = vmatpush2.msra.mxu0 0.0
        %288 = vmatprep.subr.mxu0 0.0
        %289 = vmatpush2.msra.mxu0 0.0
        %290 = vmatprep.subr.mxu0 0.0
        %291 = vmatpush2.msra.mxu0 0.0
        %292 = vmatprep.subr.mxu0 0.0
        %293 = vmatpush2.msra.mxu0 0.0
        %294 = vmatprep.subr.mxu0 0.0
        %295 = vmatpush2.msra.mxu0 0.0
        %296 = vmatprep.subr.mxu0 0.0
        %297 = vmatpush2.msra.mxu0 0.0
        %298 = vmatprep.subr.mxu0 0.0
        %299 = vmatpush2.msra.mxu0 0.0
        %300 = vmatprep.mubr.f32.mxu0 0.0
        %301 = vmatmul.mubr.f32.gmra.mxu0 %v230
        %v302 = vpop.f32.mrf.mxu0
        %v303 = vadd.f32 %v227, %v302
        %v304 = vpop.f32.mrf.mxu0
        %305 = vdwg.mxu0
        %vm306 = vcmask 261120
        %v307 = vsel %vm306, %v303, 0.0
        %308 = vadd.xlane.f32.xlu0 %v307
        %v309 = vpop.xlane.xlu0 %308
        %v310 = vrcp.pop 32.0
        %v311 = vmul.f32 %v309, %v310
        %v312 = vsub.f32 %v303, %v311
        %v313 = vmul.f32 %v312, %v312
        %v314 = vsel %vm306, %v313, 0.0
        %315 = vadd.xlane.f32.xlu0 %v314
        %v316 = vpop.xlane.xlu0 %315
        %v317 = vmul.f32 %v316, %v310
        %v318 = vadd.f32 %v317, 1e-05
        %v319 = vrsqrt.pop %v318
        %v320 = vmul.f32 %v312, %v319
        %v321 = vlaneseq
        %v322 = vshrl.u32 %v321, 7
        %v323 = vsub.s32 1, %v322
        %v324 = vrot.slane %v221, %v323
        %v325 = vmul.f32 %v320, %v324
        %v326 = vlaneseq
        %v327 = vshrl.u32 %v326, 7
        %v328 = vsub.s32 2, %v327
        %v329 = vrot.slane %v221, %v328
        %v330 = vadd.f32 %v325, %v329
        %v331 = vmax.f32 %v330, 0.0
        %v332 = vld [vmem:[%s3] sm:$0xff]
        %v333 = vld [vmem:[%s3 + $0x8] sm:$0xff]
        %v334 = vld [vmem:[%s3 + $0x10] sm:$0xff]
        %v335 = vld [vmem:[%s3 + $0x18] sm:$0xff]
        %v336 = vlaneseq
        %v337 = vshrl.u32 %v336, 7
        %v338 = vsub.s32 0, %v337
        %v339 = vrot.slane %v222, %v338
        %v341 = vsel %vm306, %v331, 0
        %343 = vmatprep.subr.mxu0 0.0
        %344 = vmatpush1.msra.mxu0 0.0
        %345 = vmatprep.subr.mxu0 0.0
        %346 = vmatpush1.msra.mxu0 0.0
        %347 = vmatprep.subr.mxu0 0.0
        %348 = vmatpush1.msra.mxu0 0.0
        %349 = vmatprep.subr.mxu0 0.0
        %350 = vmatpush1.msra.mxu0 0.0
        %351 = vmatprep.subr.mxu0 0.0
        %352 = vmatpush1.msra.mxu0 0.0
        %353 = vmatprep.subr.mxu0 0.0
        %354 = vmatpush1.msra.mxu0 0.0
        %355 = vmatprep.subr.mxu0 0.0
        %356 = vmatpush1.msra.mxu0 0.0
        %357 = vmatprep.subr.mxu0 0.0
        %358 = vmatpush1.msra.mxu0 0.0
        %359 = vmatprep.subr.mxu0 0.0
        %360 = vmatpush1.msra.mxu0 0.0
        %361 = vmatprep.subr.mxu0 0.0
        %362 = vmatpush1.msra.mxu0 0.0
        %363 = vmatprep.subr.mxu0 0.0
        %364 = vmatpush1.msra.mxu0 0.0
        %365 = vmatprep.subr.mxu0 0.0
        %366 = vmatpush1.msra.mxu0 0.0
        %367 = vmatprep.subr.mxu0 0.0
        %368 = vmatpush1.msra.mxu0 %v335
        %369 = vmatprep.subr.mxu0 0.0
        %370 = vmatpush1.msra.mxu0 %v334
        %371 = vmatprep.subr.mxu0 0.0
        %372 = vmatpush1.msra.mxu0 %v333
        %373 = vmatprep.subr.mxu0 0.0
        %374 = vmatpush1.msra.mxu0 %v332
        %375 = vmatprep.subr.mxu0 0.0
        %376 = vmatpush2.msra.mxu0 0.0
        %377 = vmatprep.subr.mxu0 0.0
        %378 = vmatpush2.msra.mxu0 0.0
        %379 = vmatprep.subr.mxu0 0.0
        %380 = vmatpush2.msra.mxu0 0.0
        %381 = vmatprep.subr.mxu0 0.0
        %382 = vmatpush2.msra.mxu0 0.0
        %383 = vmatprep.subr.mxu0 0.0
        %384 = vmatpush2.msra.mxu0 0.0
        %385 = vmatprep.subr.mxu0 0.0
        %386 = vmatpush2.msra.mxu0 0.0
        %387 = vmatprep.subr.mxu0 0.0
        %388 = vmatpush2.msra.mxu0 0.0
        %389 = vmatprep.subr.mxu0 0.0
        %390 = vmatpush2.msra.mxu0 0.0
        %391 = vmatprep.subr.mxu0 0.0
        %392 = vmatpush2.msra.mxu0 0.0
        %393 = vmatprep.subr.mxu0 0.0
        %394 = vmatpush2.msra.mxu0 0.0
        %395 = vmatprep.subr.mxu0 0.0
        %396 = vmatpush2.msra.mxu0 0.0
        %397 = vmatprep.subr.mxu0 0.0
        %398 = vmatpush2.msra.mxu0 0.0
        %399 = vmatprep.subr.mxu0 0.0
        %400 = vmatpush2.msra.mxu0 0.0
        %401 = vmatprep.subr.mxu0 0.0
        %402 = vmatpush2.msra.mxu0 0.0
        %403 = vmatprep.subr.mxu0 0.0
        %404 = vmatpush2.msra.mxu0 0.0
        %405 = vmatprep.subr.mxu0 0.0
        %406 = vmatpush2.msra.mxu0 0.0
        %407 = vmatprep.mubr.f32.mxu0 0.0
        %408 = vmatmul.mubr.f32.gmra.mxu0 %v341
        %v409 = vpop.f32.mrf.mxu0
        %v410 = vadd.f32 %v339, %v409
        %v411 = vpop.f32.mrf.mxu0
        %412 = vdwg.mxu0
        %vm413 = vcmask 130048
        %v414 = vsel %vm413, %v410, 0.0
        %415 = vadd.xlane.f32.xlu0 %v414
        %v416 = vpop.xlane.xlu0 %415
        %v417 = vrcp.pop 16.0
        %v418 = vmul.f32 %v416, %v417
        %v419 = vsub.f32 %v410, %v418
        %v420 = vmul.f32 %v419, %v419
        %v421 = vsel %vm413, %v420, 0.0
        %422 = vadd.xlane.f32.xlu0 %v421
        %v423 = vpop.xlane.xlu0 %422
        %v424 = vmul.f32 %v423, %v417
        %v425 = vadd.f32 %v424, 1e-05
        %v426 = vrsqrt.pop %v425
        %v427 = vmul.f32 %v419, %v426
        %v428 = vlaneseq
        %v429 = vshrl.u32 %v428, 7
        %v430 = vsub.s32 1, %v429
        %v431 = vrot.slane %v222, %v430
        %v432 = vmul.f32 %v427, %v431
        %v433 = vlaneseq
        %v434 = vshrl.u32 %v433, 7
        %v435 = vsub.s32 2, %v434
        %v436 = vrot.slane %v222, %v435
        %v437 = vadd.f32 %v432, %v436
        %v438 = vmax.f32 %v437, 0.0
        %439 = vst.msk [vmem:[%s215] sm:$0xff] %vm413, %v438
        %s440 = sand.u32 %s137, 1
        %s441 = scalar_lea.sflag [#allocation3], %s440
        %s442 = sand.u32 %s137, 1
        %s443 = smul.addr %s442, 8
        %s444 = scalar_lea.vmem [#allocation2], %s443
        // Predicated region
        $region41: #{mlp_forward.1} parent=39 // pred_check
          %p445 = pneg %p147
        $region42: #{mlp_forward.1} parent=39 // pred_check_branch
          %447 = sbr.rel (%p445) target = $region44
        $region43: #{mlp_forward.1} parent=39 // pred_region
          %s449 = ssub.s32 128, 128
          %450 = vsyncadd %s441, %s449
          %s451 = smul.addr %s19, 128
          %s452 = scalar_lea.hbm %s5, %s451
          %s454 = sshll.u32 %s444, 4
          %s455 = int_to_ptr.vmem [resolvable:$true] %s454
          %457 = dma.vmem_to_hbm [thread:$0]  %s455, 128, %s452, %s441
        $region44: #{mlp_forward.1} parent=39 // pred_fallthru
          _
      $region40: #{mlp_forward.1} parent=5 // pred_fallthru
        _
      %p458 = scmp.le.s32.totalorder 2, %s14
      // Predicated region
      $region45: #{mlp_forward.1} parent=5 // pred_check
        %p459 = pneg %p458
      $region46: #{mlp_forward.1} parent=5 // pred_check_branch
        %461 = sbr.rel (%p459) target = $region48
      $region47: #{mlp_forward.1} parent=5 // pred_region
        %s462 = ssub.s32 %s14, 2
        // Predicated region
        $region49: #{mlp_forward.1} parent=47 // pred_check
          %p463 = pneg %p153
        $region50: #{mlp_forward.1} parent=47 // pred_check_branch
          %465 = sbr.rel (%p463) target = $region52
        $region51: #{mlp_forward.1} parent=47 // pred_region
          %s466 = sand.u32 %s138, 1
          %s467 = scalar_lea.sflag [#allocation3], %s466
          %s468 = sand.u32 %s138, 1
          %s469 = smul.addr %s468, 8
          %s470 = scalar_lea.vmem [#allocation2], %s469
          %471 = dma.done %s467, 128
        $region52: #{mlp_forward.1} parent=47 // pred_fallthru
          _
      $region48: #{mlp_forward.1} parent=5 // pred_fallthru
        _
    $region6: #{mlp_forward.1} parent=1 // loop_footer
      %s18 = sadd.s32 1, %s14
    $region7: #{mlp_forward.1} parent=1 // loop_footer_branch
      %13 = sbr.rel target = $region3
    $region8: #{mlp_forward.1} parent=1 // loop_exit
      _
    %472 = vsyncpa [#allocation3], 1
    %s473 = scalar_lea.sflag [#allocation3], 1
    %474 = vsyncpa %s473, 1

</llo_original>
